<compile_context>
chip_gen: v5e
topology: v5e:2x2
jax: 0.10.0
libtpu: 0.0.40
codegen_flags: <defaults>
</compile_context>

<pallas_src>
import math

import jax
import jax.numpy as jnp
import numpy as np
from jax.experimental import pallas as pl
from jax.experimental.pallas import tpu as pltpu


# ----------------------------------------------------------------------------
# Pre-pass kernel: batch-invariant attention probabilities (one step per head)
# ----------------------------------------------------------------------------
def gabor_probs_kernel(u_smem, r_ref, p_ref):
    """Refs:
      u_smem : (nH, 5)   SMEM  per-head RPE target vectors
      r_ref  : (5, S, S) VMEM  shared relative-position features (fetched once)
      p_ref  : (1, S, S) VMEM  softmax(probs) for this head
    """
    h = pl.program_id(0)
    # logits[q, k] = sum_d u[h, d] * R[d, q, k]   (scalar * vreg broadcasts, VPU)
    logits = r_ref[0] * u_smem[h, 0]
    for d in range(1, 5):
        logits = logits + r_ref[d] * u_smem[h, d]
    # numerically-stable softmax over keys, exact (runs nH times total, not per batch)
    m = jnp.max(logits, axis=-1, keepdims=True)
    e = jnp.exp(logits - m)
    l = jnp.sum(e, axis=-1, keepdims=True)
    p_ref[0] = (e / l).astype(p_ref.dtype)


# ----------------------------------------------------------------------------
# Hot kernel: per batch-block, Y = X @ W_h per head + one fat probs matmul
# ----------------------------------------------------------------------------
def gabor_attn_kernel(pcat_ref, x_ref, w3_ref, b_ref, o_ref):
    """Refs:
      pcat_ref : (S, nH*S)   VMEM bf16  probs, head-major along keys (resident)
      x_ref    : (Bt, S, E)  VMEM bf16  this block's activations
      w3_ref   : (nH, E, E)  VMEM bf16  fc weight per head, W_h[e_in, e_out]
      b_ref    : (1, E)      VMEM f32   fc bias
      o_ref    : (Bt, S, E)  VMEM f32   output
    """
    Bt, S, E = x_ref.shape
    nH = w3_ref.shape[0]

    x_flat = x_ref[...].reshape(Bt * S, E)                       # contiguous, free
    # Per-head value projection; leading-dim weight slice is layout-free.
    # MXU accumulates in f32; single downcast so the second matmul stays bf16.
    z = [jnp.dot(x_flat, w3_ref[h],
                 preferred_element_type=jnp.float32).astype(jnp.bfloat16)
         for h in range(nH)]                                     # nH x (Bt*S, E)

    pcat = pcat_ref[...]                                         # (S, nH*S)
    bias = jnp.broadcast_to(b_ref[...], (S, E)).astype(jnp.float32)

    for b in range(Bt):                                          # static unroll (Bt small)
        # Stack heads along the contraction axis (head-major, matches pcat layout).
        # Sublane slices at multiples of S=64 are aligned.
        zcat = jnp.concatenate([zh[b * S:(b + 1) * S, :] for zh in z], axis=0)  # (nH*S, E)
        # One K = nH*S matmul instead of nH small ones; f32 accumulate.
        acc = jnp.dot(pcat, zcat, preferred_element_type=jnp.float32)           # (S, E)
        # TODO(synk): output last dim E=32 -> masked vst; fine at 8 KiB/step, repack
        # batch into lanes if S/B ever grows enough for this to matter.
        o_ref[b] = (acc + bias).astype(o_ref.dtype)


# ----------------------------------------------------------------------------
# Wrapper: all glue hoisted, hot path is one tiny pre-pass + one fused pallas_call
# ----------------------------------------------------------------------------
def gabor_self_attention_forward(X, R5, u, w3, b2, *, num_steps=None):
    """X: (B, W, H, E); R5: (5, S, S) f32; u: (nH, 5); w3: (nH, E, E); b2: (1, E)."""
    B, W, Hs, E = X.shape
    S = W * Hs
    nH = u.shape[0]

    # --- pre-pass: probs depend only on (R, u); computed once, never per batch ---
    # TODO(synk): for the documented scale-up (W=H up to 50, S=2500) the resident
    # (5,S,S) / (S,nH*S) blocks exceed v7x's 64 MiB VMEM; tile the key axis and stream
    # probs from HBM in (Sq_tile, nH*Sk_tile) blocks instead of keeping them resident.
    probs = pl.pallas_call(
        gabor_probs_kernel,
        out_shape=jax.ShapeDtypeStruct((nH, S, S), jnp.float32),
        grid=(nH,),
        in_specs=[
            pl.BlockSpec(memory_space=pltpu.MemorySpace.SMEM),   # u (nH, 5)
            pl.BlockSpec((5, S, S), lambda h: (0, 0, 0)),        # R: fetched once
        ],
        out_specs=pl.BlockSpec((1, S, S), lambda h: (h, 0, 0)),
        compiler_params=pltpu.CompilerParams(
            dimension_semantics=("parallel",)),
    )(u.astype(jnp.float32), R5)

    # Head-major key concat: pcat[q, h*S + k] = probs[h, q, k].  Tiny one-off XLA op;
    # cast to bf16 so the hot-kernel attention matmul is a bf16 MXU matmul.
    pcat = jnp.swapaxes(probs, 0, 1).reshape(S, nH * S).astype(jnp.bfloat16)

    # --- batch blocking: 2-way split keeps both v7x TCs busy, amortizes step overhead ---
    if num_steps is None:
        num_steps = 2 if (B % 2 == 0 and B >= 2) else 1
    Bt = B // num_steps

    x_r = X.reshape(B, S, E).astype(jnp.bfloat16)   # free reshape; bf16 halves X DMA
    w3b = w3.astype(jnp.bfloat16)

    out = pl.pallas_call(
        gabor_attn_kernel,
        out_shape=jax.ShapeDtypeStruct((B, S, E), jnp.float32),
        grid=(num_steps,),
        in_specs=[
            pl.BlockSpec((S, nH * S), lambda b: (0, 0)),         # pcat: resident
            pl.BlockSpec((Bt, S, E), lambda b: (b, 0, 0)),       # X block
            pl.BlockSpec((nH, E, E), lambda b: (0, 0, 0)),       # fc weights: resident
            pl.BlockSpec((1, E), lambda b: (0, 0)),              # bias: resident
        ],
        out_specs=pl.BlockSpec((Bt, S, E), lambda b: (b, 0, 0)),
        compiler_params=pltpu.CompilerParams(
            dimension_semantics=("parallel",)),                  # v7x: both TCs busy
    )(pcat, x_r, w3b, b2)

    return out.reshape(B, W, Hs, E)                              # free reshape


# ----------------------------------------------------------------------------
# Deterministic parameter / buffer construction (mirrors __init__)
# ----------------------------------------------------------------------------
def heads_target_vectors(spreads, centers):
    inv_cov = jnp.einsum('hij,hkj->hik', spreads, spreads)
    a, b, c = inv_cov[:, 0, 0], inv_cov[:, 0, 1], inv_cov[:, 1, 1]
    mu1, mu2 = centers[:, 0], centers[:, 1]
    return -0.5 * jnp.stack(
        [-2.0 * (a * mu1 + b * mu2), -2.0 * (c * mu2 + b * mu1), a, c, 2.0 * b],
        axis=-1)                                                     # (nH, 5)


def grid2rpe5(grid, xita):
    if xita is not None:
        rot = jnp.array([[math.cos(xita), math.sin(xita)],
                         [-math.sin(xita), math.cos(xita)]], jnp.float32)
        grid = jnp.einsum('ijc,cr->ijr', grid.astype(jnp.float32), rot)
    rel = grid[None, None, :, :, :] - grid[:, :, None, None, :]      # (g,g,g,g,2)
    return jnp.concatenate(
        [rel, rel ** 2, (rel[..., 0] * rel[..., 1])[..., None]], axis=-1
    ).astype(jnp.float32)                                            # (g,g,g,g,5)


def build_rpe(num_heads, W, Hs):
    # Equivalent to the module's MAX_WIDTH_HEIGHT=50 grid followed by
    # [:W, :Hs, :W, :Hs] slicing (only the first max(W,Hs) rows matter).
    g = max(W, Hs)
    r_ = jnp.arange(g, dtype=jnp.float32)
    grid = jnp.stack(jnp.meshgrid(r_, r_, indexing='ij'), axis=-1)   # (g, g, 2)
    R = grid2rpe5(grid, 0.0)[:W, :Hs, :W, :Hs, :]                    # (W,Hs,W,Hs,5)
    # The module stores a per-head copy, but every head uses xita=0 -> identical;
    # the kernels consume a single shared copy, laid out (5, Sq, Sk).
    R_xitas = jnp.broadcast_to(R[None], (num_heads, W, Hs, W, Hs, 5))
    S = W * Hs
    R5 = jnp.transpose(R.reshape(S, S, 5), (2, 0, 1))                # (5, S, S)
    return R_xitas, R5


def prepare_fc(fc_w, fc_b, num_heads):
    """Hoisted weight re-layout:  w3[h, e_in, e_out] = fc_w[e_out, e_in*nH + h]."""
    E_out, all_head = fc_w.shape
    E_in = all_head // num_heads
    w3 = jnp.transpose(fc_w.reshape(E_out, E_in, num_heads), (2, 1, 0))  # (nH, E_in, E_out)
    return w3, fc_b.reshape(1, E_out)


def init_gabor_wave(kernel_size, n_thetas, n_lambdas=1, n_phase=1):
    # Mirrors _init_gabor_; the 'wave' parameter is NOT used in forward().
    idx = jnp.arange(kernel_size, dtype=jnp.float32) - (kernel_size - 1) / 2.0
    thetas = jnp.linspace(0.0, 2.0 * math.pi, n_thetas, endpoint=False)
    psis = (math.pi / 2.0) * jnp.arange(n_phase, dtype=jnp.float32)
    lambdas = (2.0 ** jnp.arange(n_lambdas, dtype=jnp.float32)) * 8.0
    lam = lambdas.reshape(n_lambdas, 1, 1, 1, 1)
    psi = psis.reshape(1, n_phase, 1, 1, 1)
    th = thetas.reshape(1, 1, n_thetas, 1, 1)
    y = idx.reshape(1, 1, 1, kernel_size, 1)
    x = idx.reshape(1, 1, 1, 1, kernel_size)
    x_theta = x * jnp.cos(th) + y * jnp.sin(th)
    return jnp.cos(2.0 * math.pi * x_theta / lam + psi)              # (1,1,nH,8,8)


def build_params(key, num_heads, hidden_in, mu_std=2.0, sigma_std=0.01):
    k1, k2, k3, k4 = jax.random.split(key, 4)
    centers = mu_std * jax.random.normal(k1, (num_heads, 2), jnp.float32)
    spreads = (jnp.eye(2, dtype=jnp.float32)[None]
               + sigma_std * jax.random.normal(k2, (num_heads, 2, 2), jnp.float32))
    all_head = num_heads * hidden_in
    bound = 1.0 / math.sqrt(all_head)
    fc_w = jax.random.uniform(k3, (hidden_in, all_head), jnp.float32, -bound, bound)
    fc_b = jax.random.uniform(k4, (hidden_in,), jnp.float32, -bound, bound)
    return centers, spreads, fc_w, fc_b


# ----------------------------------------------------------------------------
# Pure-JAX reference (faithful mirror of the PyTorch forward) for verification
# ----------------------------------------------------------------------------
def reference_forward(X, R_xitas, u, fc_w, fc_b):
    B, W, Hs, E = X.shape
    nH = u.shape[0]
    gaussian = jnp.einsum('hijkld,hd->ijhkl', R_xitas, u)
    probs = jax.nn.softmax(gaussian.reshape(W, Hs, nH, W * Hs), axis=-1)
    probs = probs.reshape(W, Hs, nH, W, Hs)
    Ta = jnp.transpose(X, (0, 3, 1, 2)).reshape(-1, W * Hs)
    Tb = jnp.transpose(probs, (3, 4, 0, 1, 2)).reshape(W * Hs, -1)
    ah = (Ta @ Tb).reshape(B, E, W, Hs, nH)
    ah = jnp.transpose(ah, (0, 2, 3, 1, 4)).reshape(B, W, Hs, -1)
    return ah @ fc_w.T + fc_b


# ----------------------------------------------------------------------------
if __name__ == "__main__":
    # Small config consistent with the module: INPUT_W = INPUT_H = 8,
    # num_attention_heads = 4, hidden_in (E) = 32, batch = 2.
    B, W, Hs, E, nH = 2, 8, 8, 32, 4

    key = jax.random.PRNGKey(0)
    kx, kp = jax.random.split(key)
    X = jax.random.normal(kx, (B, W, Hs, E), jnp.float32)

    centers, spreads, fc_w, fc_b = build_params(kp, nH, E)
    u = heads_target_vectors(spreads, centers)                       # (nH, 5)
    R_xitas, R5 = build_rpe(nH, W, Hs)                               # buffers
    w3, b2 = prepare_fc(fc_w, fc_b, nH)                              # hoisted re-layout
    _wave = init_gabor_wave(kernel_size=8, n_thetas=nH)
    # TODO(synk): the 'wave' Gabor parameter and the R(xita=pi/4) buffer exist in
    # __init__ but are dead code in the reference forward(); built only for fidelity.

    fwd = jax.jit(gabor_self_attention_forward)
    out = jax.block_until_ready(fwd(X, R5, u, w3, b2))

    ref = reference_forward(X, R_xitas, u, fc_w, fc_b)
    assert out.shape == (B, W, Hs, E)
    # Tolerance loosened vs. the all-f32 version because X / fc weights / probs are
    # fed to the MXU in bfloat16 (f32 accumulation); drop the bf16 casts in the
    # wrapper to recover rtol=1e-2 / atol=1e-3.
    np.testing.assert_allclose(np.asarray(out), np.asarray(ref), rtol=2e-2, atol=1e-2)

    print("KERNEL_OK")
</pallas_src>

<mosaic_0001>
module attributes {stable_mosaic.version = 11 : i64} {
  func.func @gabor_probs_kernel(%arg0: i32, %arg1: memref<4x5xf32, #tpu.memory_space<smem>>, %arg2: memref<5x64x64xf32, #tpu.memory_space<vmem>>, %arg3: memref<1x64x64xf32, #tpu.memory_space<vmem>>) attributes {dimension_semantics = [#tpu.dimension_semantics<parallel>], iteration_bounds = array<i64: 4>, scalar_prefetch = 0 : i64, scratch_operands = 0 : i64, tpu.core_type = #tpu.core_type<tc>, window_params = [{transform_indices = @transform_0, window_bounds = array<i64: 4, 5>}, {pipeline_mode = #tpu.pipeline_mode<synchronous>, transform_indices = @transform_1, window_bounds = array<i64: 5, 64, 64>}, {transform_indices = @transform_2, window_bounds = array<i64: 1, 64, 64>}]} {
    %c0 = arith.constant 0 : index
    %c0_0 = arith.constant 0 : index
    %c0_1 = arith.constant 0 : index
    %0 = vector.load %arg2[%c0, %c0_0, %c0_1] : memref<5x64x64xf32, #tpu.memory_space<vmem>>, vector<1x64x64xf32>
    %1 = vector.shape_cast %0 : vector<1x64x64xf32> to vector<64x64xf32>
    %2 = arith.index_cast %arg0 : i32 to index
    %c0_2 = arith.constant 0 : index
    %3 = memref.load %arg1[%2, %c0_2] : memref<4x5xf32, #tpu.memory_space<smem>>
    %4 = vector.broadcast %3 : f32 to vector<64x64xf32>
    %5 = arith.mulf %1, %4 : vector<64x64xf32>
    %c1 = arith.constant 1 : index
    %c0_3 = arith.constant 0 : index
    %c0_4 = arith.constant 0 : index
    %6 = vector.load %arg2[%c1, %c0_3, %c0_4] : memref<5x64x64xf32, #tpu.memory_space<vmem>>, vector<1x64x64xf32>
    %7 = vector.shape_cast %6 : vector<1x64x64xf32> to vector<64x64xf32>
    %8 = arith.index_cast %arg0 : i32 to index
    %c1_5 = arith.constant 1 : index
    %9 = memref.load %arg1[%8, %c1_5] : memref<4x5xf32, #tpu.memory_space<smem>>
    %10 = vector.broadcast %9 : f32 to vector<64x64xf32>
    %11 = arith.mulf %7, %10 : vector<64x64xf32>
    %12 = arith.addf %5, %11 : vector<64x64xf32>
    %c2 = arith.constant 2 : index
    %c0_6 = arith.constant 0 : index
    %c0_7 = arith.constant 0 : index
    %13 = vector.load %arg2[%c2, %c0_6, %c0_7] : memref<5x64x64xf32, #tpu.memory_space<vmem>>, vector<1x64x64xf32>
    %14 = vector.shape_cast %13 : vector<1x64x64xf32> to vector<64x64xf32>
    %15 = arith.index_cast %arg0 : i32 to index
    %c2_8 = arith.constant 2 : index
    %16 = memref.load %arg1[%15, %c2_8] : memref<4x5xf32, #tpu.memory_space<smem>>
    %17 = vector.broadcast %16 : f32 to vector<64x64xf32>
    %18 = arith.mulf %14, %17 : vector<64x64xf32>
    %19 = arith.addf %12, %18 : vector<64x64xf32>
    %c3 = arith.constant 3 : index
    %c0_9 = arith.constant 0 : index
    %c0_10 = arith.constant 0 : index
    %20 = vector.load %arg2[%c3, %c0_9, %c0_10] : memref<5x64x64xf32, #tpu.memory_space<vmem>>, vector<1x64x64xf32>
    %21 = vector.shape_cast %20 : vector<1x64x64xf32> to vector<64x64xf32>
    %22 = arith.index_cast %arg0 : i32 to index
    %c3_11 = arith.constant 3 : index
    %23 = memref.load %arg1[%22, %c3_11] : memref<4x5xf32, #tpu.memory_space<smem>>
    %24 = vector.broadcast %23 : f32 to vector<64x64xf32>
    %25 = arith.mulf %21, %24 : vector<64x64xf32>
    %26 = arith.addf %19, %25 : vector<64x64xf32>
    %c4 = arith.constant 4 : index
    %c0_12 = arith.constant 0 : index
    %c0_13 = arith.constant 0 : index
    %27 = vector.load %arg2[%c4, %c0_12, %c0_13] : memref<5x64x64xf32, #tpu.memory_space<vmem>>, vector<1x64x64xf32>
    %28 = vector.shape_cast %27 : vector<1x64x64xf32> to vector<64x64xf32>
    %29 = arith.index_cast %arg0 : i32 to index
    %c4_14 = arith.constant 4 : index
    %30 = memref.load %arg1[%29, %c4_14] : memref<4x5xf32, #tpu.memory_space<smem>>
    %31 = vector.broadcast %30 : f32 to vector<64x64xf32>
    %32 = arith.mulf %28, %31 : vector<64x64xf32>
    %33 = arith.addf %26, %32 : vector<64x64xf32>
    %cst = arith.constant dense<0xFF800000> : vector<64xf32>
    %34 = vector.multi_reduction <maximumf>, %33, %cst [1] : vector<64x64xf32> to vector<64xf32>
    %35 = vector.shape_cast %34 : vector<64xf32> to vector<64x1xf32>
    %36 = vector.broadcast %35 : vector<64x1xf32> to vector<64x64xf32>
    %37 = arith.subf %33, %36 : vector<64x64xf32>
    %38 = math.exp %37 : vector<64x64xf32>
    %cst_15 = arith.constant dense<0.000000e+00> : vector<64xf32>
    %39 = vector.multi_reduction <add>, %38, %cst_15 [1] : vector<64x64xf32> to vector<64xf32>
    %40 = vector.shape_cast %39 : vector<64xf32> to vector<64x1xf32>
    %41 = vector.broadcast %40 : vector<64x1xf32> to vector<64x64xf32>
    %42 = arith.divf %38, %41 : vector<64x64xf32>
    %c0_16 = arith.constant 0 : index
    %c0_17 = arith.constant 0 : index
    %c0_18 = arith.constant 0 : index
    %43 = vector.load %arg3[%c0_16, %c0_17, %c0_18] : memref<1x64x64xf32, #tpu.memory_space<vmem>>, vector<1x64x64xf32>
    %44 = vector.shape_cast %43 : vector<1x64x64xf32> to vector<64x64xf32>
    %45 = vector.shape_cast %42 : vector<64x64xf32> to vector<1x64x64xf32>
    tpu.vector_store %arg3[%c0_16, %c0_17, %c0_18], %45 {strides = array<i32>} : memref<1x64x64xf32, #tpu.memory_space<vmem>>, vector<1x64x64xf32>,
    return
  }
  func.func @transform_0(%arg0: i32) -> (i32, i32) {
    %c0_i32 = arith.constant 0 : i32
    %c0_i32_0 = arith.constant 0 : i32
    %c0_i32_1 = arith.constant 0 : i32
    return %c0_i32, %c0_i32_0 : i32, i32
  }
  func.func @transform_1(%arg0: i32) -> (i32, i32, i32) {
    %c0_i32 = arith.constant 0 : i32
    %c0_i32_0 = arith.constant 0 : i32
    %c0_i32_1 = arith.constant 0 : i32
    %c0_i32_2 = arith.constant 0 : i32
    return %c0_i32, %c0_i32_0, %c0_i32_1 : i32, i32, i32
  }
  func.func @transform_2(%arg0: i32) -> (i32, i32, i32) {
    %c0_i32 = arith.constant 0 : i32
    %c0_i32_0 = arith.constant 0 : i32
    %c0_i32_1 = arith.constant 0 : i32
    return %arg0, %c0_i32, %c0_i32_0 : i32, i32, i32
  }
}

module attributes {stable_mosaic.version = 11 : i64} {
  func.func @gabor_attn_kernel(%arg0: i32, %arg1: memref<64x256xbf16, #tpu.memory_space<vmem>>, %arg2: memref<1x64x32xbf16, #tpu.memory_space<vmem>>, %arg3: memref<4x32x32xbf16, #tpu.memory_space<vmem>>, %arg4: memref<1x32xf32, #tpu.memory_space<vmem>>, %arg5: memref<1x64x32xf32, #tpu.memory_space<vmem>>) attributes {dimension_semantics = [#tpu.dimension_semantics<parallel>], iteration_bounds = array<i64: 2>, scalar_prefetch = 0 : i64, scratch_operands = 0 : i64, tpu.core_type = #tpu.core_type<tc>, window_params = [{pipeline_mode = #tpu.pipeline_mode<synchronous>, transform_indices = @transform_0, window_bounds = array<i64: 64, 256>}, {transform_indices = @transform_1, window_bounds = array<i64: 1, 64, 32>}, {pipeline_mode = #tpu.pipeline_mode<synchronous>, transform_indices = @transform_2, window_bounds = array<i64: 4, 32, 32>}, {pipeline_mode = #tpu.pipeline_mode<synchronous>, transform_indices = @transform_3, window_bounds = array<i64: 1, 32>}, {transform_indices = @transform_4, window_bounds = array<i64: 1, 64, 32>}]} {
    %c0 = arith.constant 0 : index
    %c0_0 = arith.constant 0 : index
    %c0_1 = arith.constant 0 : index
    %0 = vector.load %arg2[%c0, %c0_0, %c0_1] : memref<1x64x32xbf16, #tpu.memory_space<vmem>>, vector<1x64x32xbf16>
    %1 = vector.shape_cast %0 : vector<1x64x32xbf16> to vector<64x32xbf16>
    %c0_2 = arith.constant 0 : index
    %c0_3 = arith.constant 0 : index
    %c0_4 = arith.constant 0 : index
    %2 = vector.load %arg3[%c0_2, %c0_3, %c0_4] : memref<4x32x32xbf16, #tpu.memory_space<vmem>>, vector<1x32x32xbf16>
    %3 = vector.shape_cast %2 : vector<1x32x32xbf16> to vector<32x32xbf16>
    %cst = arith.constant dense<0.000000e+00> : vector<64x32xf32>
    %4 = tpu.matmul %1, %3, %cst {dimension_numbers = #tpu.dot_dimension_numbers<[1], [0], [0], [1], [0, 0, 1, 1], [], []>} : vector<64x32xbf16>, vector<32x32xbf16>, vector<64x32xf32> -> vector<64x32xf32>
    %5 = arith.truncf %4 : vector<64x32xf32> to vector<64x32xbf16>
    %c1 = arith.constant 1 : index
    %c0_5 = arith.constant 0 : index
    %c0_6 = arith.constant 0 : index
    %6 = vector.load %arg3[%c1, %c0_5, %c0_6] : memref<4x32x32xbf16, #tpu.memory_space<vmem>>, vector<1x32x32xbf16>
    %7 = vector.shape_cast %6 : vector<1x32x32xbf16> to vector<32x32xbf16>
    %cst_7 = arith.constant dense<0.000000e+00> : vector<64x32xf32>
    %8 = tpu.matmul %1, %7, %cst_7 {dimension_numbers = #tpu.dot_dimension_numbers<[1], [0], [0], [1], [0, 0, 1, 1], [], []>} : vector<64x32xbf16>, vector<32x32xbf16>, vector<64x32xf32> -> vector<64x32xf32>
    %9 = arith.truncf %8 : vector<64x32xf32> to vector<64x32xbf16>
    %c2 = arith.constant 2 : index
    %c0_8 = arith.constant 0 : index
    %c0_9 = arith.constant 0 : index
    %10 = vector.load %arg3[%c2, %c0_8, %c0_9] : memref<4x32x32xbf16, #tpu.memory_space<vmem>>, vector<1x32x32xbf16>
    %11 = vector.shape_cast %10 : vector<1x32x32xbf16> to vector<32x32xbf16>
    %cst_10 = arith.constant dense<0.000000e+00> : vector<64x32xf32>
    %12 = tpu.matmul %1, %11, %cst_10 {dimension_numbers = #tpu.dot_dimension_numbers<[1], [0], [0], [1], [0, 0, 1, 1], [], []>} : vector<64x32xbf16>, vector<32x32xbf16>, vector<64x32xf32> -> vector<64x32xf32>
    %13 = arith.truncf %12 : vector<64x32xf32> to vector<64x32xbf16>
    %c3 = arith.constant 3 : index
    %c0_11 = arith.constant 0 : index
    %c0_12 = arith.constant 0 : index
    %14 = vector.load %arg3[%c3, %c0_11, %c0_12] : memref<4x32x32xbf16, #tpu.memory_space<vmem>>, vector<1x32x32xbf16>
    %15 = vector.shape_cast %14 : vector<1x32x32xbf16> to vector<32x32xbf16>
    %cst_13 = arith.constant dense<0.000000e+00> : vector<64x32xf32>
    %16 = tpu.matmul %1, %15, %cst_13 {dimension_numbers = #tpu.dot_dimension_numbers<[1], [0], [0], [1], [0, 0, 1, 1], [], []>} : vector<64x32xbf16>, vector<32x32xbf16>, vector<64x32xf32> -> vector<64x32xf32>
    %17 = arith.truncf %16 : vector<64x32xf32> to vector<64x32xbf16>
    %c0_14 = arith.constant 0 : index
    %c0_15 = arith.constant 0 : index
    %18 = vector.load %arg1[%c0_14, %c0_15] : memref<64x256xbf16, #tpu.memory_space<vmem>>, vector<64x256xbf16>
    %c0_16 = arith.constant 0 : index
    %c0_17 = arith.constant 0 : index
    %19 = vector.load %arg4[%c0_16, %c0_17] : memref<1x32xf32, #tpu.memory_space<vmem>>, vector<1x32xf32>
    %20 = vector.shape_cast %19 : vector<1x32xf32> to vector<1x32xf32>
    %21 = vector.broadcast %20 : vector<1x32xf32> to vector<64x32xf32>
    %22 = tpu.concatenate %5, %9, %13, %17 in 0 : vector<64x32xbf16>, vector<64x32xbf16>, vector<64x32xbf16>, vector<64x32xbf16> -> vector<256x32xbf16>
    %cst_18 = arith.constant dense<0.000000e+00> : vector<64x32xf32>
    %23 = tpu.matmul %18, %22, %cst_18 {dimension_numbers = #tpu.dot_dimension_numbers<[1], [0], [0], [1], [0, 0, 1, 1], [], []>} : vector<64x256xbf16>, vector<256x32xbf16>, vector<64x32xf32> -> vector<64x32xf32>
    %24 = arith.addf %23, %21 : vector<64x32xf32>
    %c0_19 = arith.constant 0 : index
    %c0_20 = arith.constant 0 : index
    %c0_21 = arith.constant 0 : index
    %25 = vector.load %arg5[%c0_19, %c0_20, %c0_21] : memref<1x64x32xf32, #tpu.memory_space<vmem>>, vector<1x64x32xf32>
    %26 = vector.shape_cast %25 : vector<1x64x32xf32> to vector<64x32xf32>
    %27 = vector.shape_cast %24 : vector<64x32xf32> to vector<1x64x32xf32>
    tpu.vector_store %arg5[%c0_19, %c0_20, %c0_21], %27 {strides = array<i32>} : memref<1x64x32xf32, #tpu.memory_space<vmem>>, vector<1x64x32xf32>,
    return
  }
  func.func @transform_0(%arg0: i32) -> (i32, i32) {
    %c0_i32 = arith.constant 0 : i32
    %c0_i32_0 = arith.constant 0 : i32
    %c0_i32_1 = arith.constant 0 : i32
    return %c0_i32, %c0_i32_0 : i32, i32
  }
  func.func @transform_1(%arg0: i32) -> (i32, i32, i32) {
    %c0_i32 = arith.constant 0 : i32
    %c0_i32_0 = arith.constant 0 : i32
    %c0_i32_1 = arith.constant 0 : i32
    return %arg0, %c0_i32, %c0_i32_0 : i32, i32, i32
  }
  func.func @transform_2(%arg0: i32) -> (i32, i32, i32) {
    %c0_i32 = arith.constant 0 : i32
    %c0_i32_0 = arith.constant 0 : i32
    %c0_i32_1 = arith.constant 0 : i32
    %c0_i32_2 = arith.constant 0 : i32
    return %c0_i32, %c0_i32_0, %c0_i32_1 : i32, i32, i32
  }
  func.func @transform_3(%arg0: i32) -> (i32, i32) {
    %c0_i32 = arith.constant 0 : i32
    %c0_i32_0 = arith.constant 0 : i32
    %c0_i32_1 = arith.constant 0 : i32
    return %c0_i32, %c0_i32_0 : i32, i32
  }
  func.func @transform_4(%arg0: i32) -> (i32, i32, i32) {
    %c0_i32 = arith.constant 0 : i32
    %c0_i32_0 = arith.constant 0 : i32
    %c0_i32_1 = arith.constant 0 : i32
    return %arg0, %c0_i32, %c0_i32_0 : i32, i32, i32
  }
}

</mosaic_0001>

<llo_original>
// kernel: gabor_self_attention_forward.2
$region0: #{gabor_self_attention_forward.2}
  #allocation0 [shape = 'u32[]', space=smem, size = 0x4, offset = 0x4, fixed_abs, tag = 'smem constant byte address 0x4 - core index']
  #allocation1 [shape = 'u32[72,128]{1,0:T(1,128)}', space=vmem, size = 0x9000, scoped, tag = 'internal scratch']
  %s0 = inlined_call_operand.hbm [shape: f32[4,5], index: 0, kind: input, shape index: {}]
  %s1 = inlined_call_operand.hbm [shape: f32[5,64,64], index: 1, kind: input, shape index: {}]
  %s2 = inlined_call_operand.vmem [shape: f32[4,64,64], index: 2, kind: output, shape index: {}]
  %s3 = sld [smem:[#allocation0]]
  $region49: #{gabor_self_attention_forward.2} parent=0
    _
  %s5 = ssub.s32 1, %s3
  %s6 = scalar_select 0, %s5, %s3
  $region1: #{gabor_self_attention_forward.2} parent=0
    #allocation2 [shape = 'u8[2048]{0}', space=smem, size = 0x800, scoped, tag = 'input window, operand 0, single buffered']
    #allocation3 [shape = 's32[2]{0}', space=sflag, size = 0x8, scoped, tag = 'scoped memory for gabor_self_attention_forward.2']
    #allocation4 [shape = 's32[2]{0}', space=sflag, size = 0x8, scoped, tag = 'scoped memory for gabor_self_attention_forward.2']
    #allocation5 [shape = 'u8[163840]{0}', space=vmem, size = 0x28000, scoped, tag = 'input window, operand 1, single buffered']
    %7 = vsyncpa [#allocation4], 0
    %8 = vsyncpa [#allocation3], 0
    loop: start=0, step=1, limit=6
    $region2: #{gabor_self_attention_forward.2} parent=1 // loop_pre_header
      _
    $region3: #{gabor_self_attention_forward.2} parent=1 // loop_header
      %s10 = sphi 0, %s14
      %p11 = scmp.ge.s32.totalorder %s10, 6
      %s18 = sphi 0, %s18
      %s20 = sphi 0, %s18
      %s21 = sphi 0, %s20
      %s35 = sphi 0, %s21
      %s39 = sphi 0, %s39
      %s41 = sphi 0, %s39
      %s42 = sphi 0, %s41
      %s56 = sphi 0, %s42
      %s62 = sphi 0, %s64
      %s65 = sphi 0, %s62
      %s66 = sphi 0, %s65
      %s82 = sphi 0, %s66
    $region4: #{gabor_self_attention_forward.2} parent=1 // loop_header_branch
      %13 = sbr.rel (%p11) target = $region8
    $region5: #{gabor_self_attention_forward.2} parent=1 // loop_body
      %s15 = ssub.s32 %s10, 1
      %s16 = ssub.s32 %s10, 2
      %s17 = sadd.s32 %s10, 1
      %s19 = sadd.s32 %s18, 1
      %p22 = scmp.eq.s32.totalorder %s10, 3
      %p23 = scmp.ne.s32.totalorder %s18, %s20
      %p24 = scmp.eq.s32.totalorder %s10, 0
      %p25 = por %p23, %p24
      %p26 = scmp.ne.s32.totalorder %s18, %s20
      %p27 = scmp.eq.s32.totalorder %s15, 3
      %p28 = por %p26, %p27
      %p29 = scmp.ne.s32.totalorder %s20, %s21
      %p30 = scmp.eq.s32.totalorder %s15, 0
      %p31 = por %p29, %p30
      %p32 = scmp.ne.s32.totalorder %s20, %s21
      %p33 = scmp.eq.s32.totalorder %s16, 3
      %p34 = por %p32, %p33
      %p36 = scmp.ne.s32.totalorder %s21, %s35
      %p37 = scmp.eq.s32.totalorder %s16, 0
      %p38 = por %p36, %p37
      %s40 = sadd.s32 %s39, 1
      %p43 = scmp.eq.s32.totalorder %s10, 3
      %p44 = scmp.ne.s32.totalorder %s39, %s41
      %p45 = scmp.eq.s32.totalorder %s10, 0
      %p46 = por %p44, %p45
      %p47 = scmp.ne.s32.totalorder %s39, %s41
      %p48 = scmp.eq.s32.totalorder %s15, 3
      %p49 = por %p47, %p48
      %p50 = scmp.ne.s32.totalorder %s41, %s42
      %p51 = scmp.eq.s32.totalorder %s15, 0
      %p52 = por %p50, %p51
      %p53 = scmp.ne.s32.totalorder %s41, %s42
      %p54 = scmp.eq.s32.totalorder %s16, 3
      %p55 = por %p53, %p54
      %p57 = scmp.ne.s32.totalorder %s42, %s56
      %p58 = scmp.eq.s32.totalorder %s16, 0
      %p59 = por %p57, %p58
      %s60 = ssub.s32 %s10, %s17
      %p61 = scmp.eq.s32.totalorder %s60, 0
      %s63 = sadd.s32 %s62, 1
      %s64 = scalar_select %p61, %s62, %s63
      %p67 = pneg %p61
      %p68 = scmp.eq.s32.totalorder %s10, 3
      %p69 = por %p67, %p68
      %p70 = scmp.ne.s32.totalorder %s62, %s65
      %p71 = scmp.eq.s32.totalorder %s10, 0
      %p72 = por %p70, %p71
      %p73 = scmp.ne.s32.totalorder %s62, %s65
      %p74 = scmp.eq.s32.totalorder %s15, 3
      %p75 = por %p73, %p74
      %p76 = scmp.ne.s32.totalorder %s65, %s66
      %p77 = scmp.eq.s32.totalorder %s15, 0
      %p78 = por %p76, %p77
      %p79 = scmp.ne.s32.totalorder %s65, %s66
      %p80 = scmp.eq.s32.totalorder %s16, 3
      %p81 = por %p79, %p80
      %p83 = scmp.ne.s32.totalorder %s66, %s82
      %p84 = scmp.eq.s32.totalorder %s16, 0
      %p85 = por %p83, %p84
      %p86 = scmp.le.s32.totalorder 1, %s10
      %p87 = scmp.lt.s32.totalorder %s10, 5
      %p88 = pnand %p86, %p87
      %p89 = pneg %p88
      // Predicated region
      $region9: #{gabor_self_attention_forward.2} parent=5 // pred_check
        _
      $region10: #{gabor_self_attention_forward.2} parent=5 // pred_check_branch
        %91 = sbr.rel (%p88) target = $region12
      $region11: #{gabor_self_attention_forward.2} parent=5 // pred_region
        %s92 = ssub.s32 %s10, 1
        // Predicated region
        $region13: #{gabor_self_attention_forward.2} parent=11 // pred_check
          %p93 = pneg %p31
        $region14: #{gabor_self_attention_forward.2} parent=11 // pred_check_branch
          %95 = sbr.rel (%p93) target = $region16
        $region15: #{gabor_self_attention_forward.2} parent=11 // pred_region
          %97 = vsyncadd [#allocation4], 0
          %s99 = sshll.u32 %s0, 4
          %s100 = int_to_ptr.hbm [resolvable:$true] %s99
          %102 = dma.hbm_to_smem %s100, 64, [#allocation2], [#allocation4]
        $region16: #{gabor_self_attention_forward.2} parent=11 // pred_fallthru
          _
        // Predicated region
        $region17: #{gabor_self_attention_forward.2} parent=11 // pred_check
          %p103 = pneg %p52
        $region18: #{gabor_self_attention_forward.2} parent=11 // pred_check_branch
          %105 = sbr.rel (%p103) target = $region20
        $region19: #{gabor_self_attention_forward.2} parent=11 // pred_region
          %107 = vsyncadd [#allocation3], 0
          %s108 = sshll.u32 %s1, 4
          %s109 = int_to_ptr.hbm [resolvable:$true] %s108
          %s110 = sshll.u32 [#allocation5], 4
          %s111 = int_to_ptr.vmem [resolvable:$true] %s110
          %116 = dma.hbm_to_vmem [thread:$0]  %s109, 5120, %s111, [#allocation3], 128, 128, 8
        $region20: #{gabor_self_attention_forward.2} parent=11 // pred_fallthru
          _
      $region12: #{gabor_self_attention_forward.2} parent=5 // pred_fallthru
        _
      %p117 = scmp.lt.s32.totalorder %s10, 4
      // Predicated region
      $region21: #{gabor_self_attention_forward.2} parent=5 // pred_check
        %p118 = pneg %p117
      $region22: #{gabor_self_attention_forward.2} parent=5 // pred_check_branch
        %120 = sbr.rel (%p118) target = $region24
      $region23: #{gabor_self_attention_forward.2} parent=5 // pred_region
        _
      $region24: #{gabor_self_attention_forward.2} parent=5 // pred_fallthru
        _
      %p121 = scmp.le.s32.totalorder 1, %s10
      %p122 = scmp.lt.s32.totalorder %s10, 5
      %p123 = pnand %p121, %p122
      %p124 = pneg %p123
      // Predicated region
      $region25: #{gabor_self_attention_forward.2} parent=5 // pred_check
        _
      $region26: #{gabor_self_attention_forward.2} parent=5 // pred_check_branch
        %126 = sbr.rel (%p123) target = $region28
      $region27: #{gabor_self_attention_forward.2} parent=5 // pred_region
        %s127 = ssub.s32 %s10, 1
        // Predicated region
        $region29: #{gabor_self_attention_forward.2} parent=27 // pred_check
          %p128 = pneg %p31
        $region30: #{gabor_self_attention_forward.2} parent=27 // pred_check_branch
          %130 = sbr.rel (%p128) target = $region32
        $region31: #{gabor_self_attention_forward.2} parent=27 // pred_region
          %132 = dma.done [#allocation4], 64
        $region32: #{gabor_self_attention_forward.2} parent=27 // pred_fallthru
          _
        // Predicated region
        $region33: #{gabor_self_attention_forward.2} parent=27 // pred_check
          %p133 = pneg %p52
        $region34: #{gabor_self_attention_forward.2} parent=27 // pred_check_branch
          %135 = sbr.rel (%p133) target = $region36
        $region35: #{gabor_self_attention_forward.2} parent=27 // pred_region
          %137 = dma.done [#allocation3], 5120
        $region36: #{gabor_self_attention_forward.2} parent=27 // pred_fallthru
          _
        %138 = sfence
        %p139 = pneg %p31
        %p140 = pneg %p28
        %p141 = pneg %p52
        %p142 = pneg %p49
        %p143 = pneg %p78
        %p144 = pneg %p75
        %p145 = scmp.lt.s32.totalorder %s15, 3
        %s146 = scalar_select %p145, %s15, 3
        %s147 = smul.addr %s146, 8
        %s148 = smul.addr %s147, 8
        %s149 = scalar_lea.vmem %s2, %s148
        %p150 = scmp.lt.s32.totalorder %s15, 3
        %s151 = scalar_select %p150, %s15, 3
        %s152 = smul.addr %s151, 8
        %s153 = smul.addr %s152, 8
        %s154 = scalar_lea.vmem %s2, %s153
        %v155 = vld [vmem:[#allocation5] sm:$0xff]
        %v156 = vld [vmem:[#allocation5 + $0x8] sm:$0xff]
        %v157 = vld [vmem:[#allocation5 + $0x10] sm:$0xff]
        %v158 = vld [vmem:[#allocation5 + $0x18] sm:$0xff]
        %v159 = vld [vmem:[#allocation5 + $0x20] sm:$0xff]
        %v160 = vld [vmem:[#allocation5 + $0x28] sm:$0xff]
        %v161 = vld [vmem:[#allocation5 + $0x30] sm:$0xff]
        %v162 = vld [vmem:[#allocation5 + $0x38] sm:$0xff]
        %s163 = smul.u32 %s15, 128
        %s164 = sld [smem:[#allocation2 + %s163]]
        %v165 = vstv %s164
        %v166 = vmul.f32 %v155, %v165
        %v167 = vmul.f32 %v156, %v165
        %v168 = vmul.f32 %v157, %v165
        %v169 = vmul.f32 %v158, %v165
        %v170 = vmul.f32 %v159, %v165
        %v171 = vmul.f32 %v160, %v165
        %v172 = vmul.f32 %v161, %v165
        %v173 = vmul.f32 %v162, %v165
        %s174 = scalar_lea.vmem [#allocation5], 64
        %v175 = vld [vmem:[%s174] sm:$0xff]
        %v176 = vld [vmem:[%s174 + $0x8] sm:$0xff]
        %v177 = vld [vmem:[%s174 + $0x10] sm:$0xff]
        %v178 = vld [vmem:[%s174 + $0x18] sm:$0xff]
        %v179 = vld [vmem:[%s174 + $0x20] sm:$0xff]
        %v180 = vld [vmem:[%s174 + $0x28] sm:$0xff]
        %v181 = vld [vmem:[%s174 + $0x30] sm:$0xff]
        %v182 = vld [vmem:[%s174 + $0x38] sm:$0xff]
        %s183 = sadd.s32 %s163, 1
        %s184 = sld [smem:[#allocation2 + %s183]]
        %v185 = vstv %s184
        %v186 = vmul.f32 %v175, %v185
        %v187 = vmul.f32 %v176, %v185
        %v188 = vmul.f32 %v177, %v185
        %v189 = vmul.f32 %v178, %v185
        %v190 = vmul.f32 %v179, %v185
        %v191 = vmul.f32 %v180, %v185
        %v192 = vmul.f32 %v181, %v185
        %v193 = vmul.f32 %v182, %v185
        %v194 = vadd.f32 %v166, %v186
        %v195 = vadd.f32 %v167, %v187
        %v196 = vadd.f32 %v168, %v188
        %v197 = vadd.f32 %v169, %v189
        %v198 = vadd.f32 %v170, %v190
        %v199 = vadd.f32 %v171, %v191
        %v200 = vadd.f32 %v172, %v192
        %v201 = vadd.f32 %v173, %v193
        %s202 = scalar_lea.vmem [#allocation5], 128
        %v203 = vld [vmem:[%s202] sm:$0xff]
        %v204 = vld [vmem:[%s202 + $0x8] sm:$0xff]
        %v205 = vld [vmem:[%s202 + $0x10] sm:$0xff]
        %v206 = vld [vmem:[%s202 + $0x18] sm:$0xff]
        %v207 = vld [vmem:[%s202 + $0x20] sm:$0xff]
        %v208 = vld [vmem:[%s202 + $0x28] sm:$0xff]
        %v209 = vld [vmem:[%s202 + $0x30] sm:$0xff]
        %v210 = vld [vmem:[%s202 + $0x38] sm:$0xff]
        %s211 = sadd.s32 %s163, 2
        %s212 = sld [smem:[#allocation2 + %s211]]
        %v213 = vstv %s212
        %v214 = vmul.f32 %v203, %v213
        %v215 = vmul.f32 %v204, %v213
        %v216 = vmul.f32 %v205, %v213
        %v217 = vmul.f32 %v206, %v213
        %v218 = vmul.f32 %v207, %v213
        %v219 = vmul.f32 %v208, %v213
        %v220 = vmul.f32 %v209, %v213
        %v221 = vmul.f32 %v210, %v213
        %v222 = vadd.f32 %v194, %v214
        %v223 = vadd.f32 %v195, %v215
        %v224 = vadd.f32 %v196, %v216
        %v225 = vadd.f32 %v197, %v217
        %v226 = vadd.f32 %v198, %v218
        %v227 = vadd.f32 %v199, %v219
        %v228 = vadd.f32 %v200, %v220
        %v229 = vadd.f32 %v201, %v221
        %s230 = scalar_lea.vmem [#allocation5], 192
        %v231 = vld [vmem:[%s230] sm:$0xff]
        %v232 = vld [vmem:[%s230 + $0x8] sm:$0xff]
        %v233 = vld [vmem:[%s230 + $0x10] sm:$0xff]
        %v234 = vld [vmem:[%s230 + $0x18] sm:$0xff]
        %v235 = vld [vmem:[%s230 + $0x20] sm:$0xff]
        %v236 = vld [vmem:[%s230 + $0x28] sm:$0xff]
        %v237 = vld [vmem:[%s230 + $0x30] sm:$0xff]
        %v238 = vld [vmem:[%s230 + $0x38] sm:$0xff]
        %s239 = sadd.s32 %s163, 3
        %s240 = sld [smem:[#allocation2 + %s239]]
        %v241 = vstv %s240
        %v242 = vmul.f32 %v231, %v241
        %v243 = vmul.f32 %v232, %v241
        %v244 = vmul.f32 %v233, %v241
        %v245 = vmul.f32 %v234, %v241
        %v246 = vmul.f32 %v235, %v241
        %v247 = vmul.f32 %v236, %v241
        %v248 = vmul.f32 %v237, %v241
        %v249 = vmul.f32 %v238, %v241
        %v250 = vadd.f32 %v222, %v242
        %v251 = vadd.f32 %v223, %v243
        %v252 = vadd.f32 %v224, %v244
        %v253 = vadd.f32 %v225, %v245
        %v254 = vadd.f32 %v226, %v246
        %v255 = vadd.f32 %v227, %v247
        %v256 = vadd.f32 %v228, %v248
        %v257 = vadd.f32 %v229, %v249
        %s258 = scalar_lea.vmem [#allocation5], 256
        %v259 = vld [vmem:[%s258] sm:$0xff]
        %v260 = vld [vmem:[%s258 + $0x8] sm:$0xff]
        %v261 = vld [vmem:[%s258 + $0x10] sm:$0xff]
        %v262 = vld [vmem:[%s258 + $0x18] sm:$0xff]
        %v263 = vld [vmem:[%s258 + $0x20] sm:$0xff]
        %v264 = vld [vmem:[%s258 + $0x28] sm:$0xff]
        %v265 = vld [vmem:[%s258 + $0x30] sm:$0xff]
        %v266 = vld [vmem:[%s258 + $0x38] sm:$0xff]
        %s267 = sadd.s32 %s163, 4
        %s268 = sld [smem:[#allocation2 + %s267]]
        %v269 = vstv %s268
        %v270 = vmul.f32 %v259, %v269
        %v271 = vmul.f32 %v260, %v269
        %v272 = vmul.f32 %v261, %v269
        %v273 = vmul.f32 %v262, %v269
        %v274 = vmul.f32 %v263, %v269
        %v275 = vmul.f32 %v264, %v269
        %v276 = vmul.f32 %v265, %v269
        %v277 = vmul.f32 %v266, %v269
        %v278 = vadd.f32 %v250, %v270
        %v279 = vadd.f32 %v251, %v271
        %v280 = vadd.f32 %v252, %v272
        %v281 = vadd.f32 %v253, %v273
        %v282 = vadd.f32 %v254, %v274
        %v283 = vadd.f32 %v255, %v275
        %v284 = vadd.f32 %v256, %v276
        %v285 = vadd.f32 %v257, %v277
        %vm286 = vcmask 523264
        %v287 = vsel %vm286, %v278, -inf
        %288 = vmax.xlane.f32.xlu0 %v287
        %v289 = vpop.xlane.xlu0 %288
        %v290 = vsel %vm286, %v279, -inf
        %291 = vmax.xlane.f32.xlu0 %v290
        %v292 = vpop.xlane.xlu0 %291
        %v293 = vsel %vm286, %v280, -inf
        %294 = vmax.xlane.f32.xlu0 %v293
        %v295 = vpop.xlane.xlu0 %294
        %v296 = vsel %vm286, %v281, -inf
        %297 = vmax.xlane.f32.xlu0 %v296
        %v298 = vpop.xlane.xlu0 %297
        %v299 = vsel %vm286, %v282, -inf
        %300 = vmax.xlane.f32.xlu0 %v299
        %v301 = vpop.xlane.xlu0 %300
        %v302 = vsel %vm286, %v283, -inf
        %303 = vmax.xlane.f32.xlu0 %v302
        %v304 = vpop.xlane.xlu0 %303
        %v305 = vsel %vm286, %v284, -inf
        %306 = vmax.xlane.f32.xlu0 %v305
        %v307 = vpop.xlane.xlu0 %306
        %v308 = vsel %vm286, %v285, -inf
        %309 = vmax.xlane.f32.xlu0 %v308
        %v310 = vpop.xlane.xlu0 %309
        %v311 = vsub.f32 %v278, %v289
        %v312 = vsub.f32 %v279, %v292
        %v313 = vsub.f32 %v280, %v295
        %v314 = vsub.f32 %v281, %v298
        %v315 = vsub.f32 %v282, %v301
        %v316 = vsub.f32 %v283, %v304
        %v317 = vsub.f32 %v284, %v307
        %v318 = vsub.f32 %v285, %v310
        %v319 = vmul.f32 %v311, 1.442695
        %v320 = vpow.pop %v319
        %v321 = vmul.f32 %v312, 1.442695
        %v322 = vpow.pop %v321
        %v323 = vmul.f32 %v313, 1.442695
        %v324 = vpow.pop %v323
        %v325 = vmul.f32 %v314, 1.442695
        %v326 = vpow.pop %v325
        %v327 = vmul.f32 %v315, 1.442695
        %v328 = vpow.pop %v327
        %v329 = vmul.f32 %v316, 1.442695
        %v330 = vpow.pop %v329
        %v331 = vmul.f32 %v317, 1.442695
        %v332 = vpow.pop %v331
        %v333 = vmul.f32 %v318, 1.442695
        %v334 = vpow.pop %v333
        %v335 = vsel %vm286, %v320, 0.0
        %336 = vadd.xlane.f32.xlu0 %v335
        %v337 = vpop.xlane.xlu0 %336
        %v338 = vsel %vm286, %v322, 0.0
        %339 = vadd.xlane.f32.xlu0 %v338
        %v340 = vpop.xlane.xlu0 %339
        %v341 = vsel %vm286, %v324, 0.0
        %342 = vadd.xlane.f32.xlu0 %v341
        %v343 = vpop.xlane.xlu0 %342
        %v344 = vsel %vm286, %v326, 0.0
        %345 = vadd.xlane.f32.xlu0 %v344
        %v346 = vpop.xlane.xlu0 %345
        %v347 = vsel %vm286, %v328, 0.0
        %348 = vadd.xlane.f32.xlu0 %v347
        %v349 = vpop.xlane.xlu0 %348
        %v350 = vsel %vm286, %v330, 0.0
        %351 = vadd.xlane.f32.xlu0 %v350
        %v352 = vpop.xlane.xlu0 %351
        %v353 = vsel %vm286, %v332, 0.0
        %354 = vadd.xlane.f32.xlu0 %v353
        %v355 = vpop.xlane.xlu0 %354
        %v356 = vsel %vm286, %v334, 0.0
        %357 = vadd.xlane.f32.xlu0 %v356
        %v358 = vpop.xlane.xlu0 %357
        %v359 = vrcp.pop %v337
        %v360 = vmul.f32 %v337, %v359
        %v361 = vsub.f32 1.0, %v360
        %v362 = vmul.f32 %v359, %v361
        %v363 = vadd.f32 %v359, %v362
        %vm364 = vweird.f32 %v337
        %vm365 = vweird.f32 %v359
        %vm366 = vmor %vm364, %vm365
        %v367 = vsel %vm366, %v359, %v363
        %v368 = vand.u32 2147483647, %v337
        %vm369 = vcmp.eq.f32.partialorder %v368, 8.507059e+37
        %v370 = vand.u32 %v337, 2147483648
        %v371 = vor.u32 1.1754944e-38, %v370
        %v372 = vsel %vm369, %v371, %v367
        %v373 = vmul.f32 %v320, %v372
        %v374 = vrcp.pop %v340
        %v375 = vmul.f32 %v340, %v374
        %v376 = vsub.f32 1.0, %v375
        %v377 = vmul.f32 %v374, %v376
        %v378 = vadd.f32 %v374, %v377
        %vm379 = vweird.f32 %v340
        %vm380 = vweird.f32 %v374
        %vm381 = vmor %vm379, %vm380
        %v382 = vsel %vm381, %v374, %v378
        %v383 = vand.u32 2147483647, %v340
        %vm384 = vcmp.eq.f32.partialorder %v383, 8.507059e+37
        %v385 = vand.u32 %v340, 2147483648
        %v386 = vor.u32 1.1754944e-38, %v385
        %v387 = vsel %vm384, %v386, %v382
        %v388 = vmul.f32 %v322, %v387
        %v389 = vrcp.pop %v343
        %v390 = vmul.f32 %v343, %v389
        %v391 = vsub.f32 1.0, %v390
        %v392 = vmul.f32 %v389, %v391
        %v393 = vadd.f32 %v389, %v392
        %vm394 = vweird.f32 %v343
        %vm395 = vweird.f32 %v389
        %vm396 = vmor %vm394, %vm395
        %v397 = vsel %vm396, %v389, %v393
        %v398 = vand.u32 2147483647, %v343
        %vm399 = vcmp.eq.f32.partialorder %v398, 8.507059e+37
        %v400 = vand.u32 %v343, 2147483648
        %v401 = vor.u32 1.1754944e-38, %v400
        %v402 = vsel %vm399, %v401, %v397
        %v403 = vmul.f32 %v324, %v402
        %v404 = vrcp.pop %v346
        %v405 = vmul.f32 %v346, %v404
        %v406 = vsub.f32 1.0, %v405
        %v407 = vmul.f32 %v404, %v406
        %v408 = vadd.f32 %v404, %v407
        %vm409 = vweird.f32 %v346
        %vm410 = vweird.f32 %v404
        %vm411 = vmor %vm409, %vm410
        %v412 = vsel %vm411, %v404, %v408
        %v413 = vand.u32 2147483647, %v346
        %vm414 = vcmp.eq.f32.partialorder %v413, 8.507059e+37
        %v415 = vand.u32 %v346, 2147483648
        %v416 = vor.u32 1.1754944e-38, %v415
        %v417 = vsel %vm414, %v416, %v412
        %v418 = vmul.f32 %v326, %v417
        %v419 = vrcp.pop %v349
        %v420 = vmul.f32 %v349, %v419
        %v421 = vsub.f32 1.0, %v420
        %v422 = vmul.f32 %v419, %v421
        %v423 = vadd.f32 %v419, %v422
        %vm424 = vweird.f32 %v349
        %vm425 = vweird.f32 %v419
        %vm426 = vmor %vm424, %vm425
        %v427 = vsel %vm426, %v419, %v423
        %v428 = vand.u32 2147483647, %v349
        %vm429 = vcmp.eq.f32.partialorder %v428, 8.507059e+37
        %v430 = vand.u32 %v349, 2147483648
        %v431 = vor.u32 1.1754944e-38, %v430
        %v432 = vsel %vm429, %v431, %v427
        %v433 = vmul.f32 %v328, %v432
        %v434 = vrcp.pop %v352
        %v435 = vmul.f32 %v352, %v434
        %v436 = vsub.f32 1.0, %v435
        %v437 = vmul.f32 %v434, %v436
        %v438 = vadd.f32 %v434, %v437
        %vm439 = vweird.f32 %v352
        %vm440 = vweird.f32 %v434
        %vm441 = vmor %vm439, %vm440
        %v442 = vsel %vm441, %v434, %v438
        %v443 = vand.u32 2147483647, %v352
        %vm444 = vcmp.eq.f32.partialorder %v443, 8.507059e+37
        %v445 = vand.u32 %v352, 2147483648
        %v446 = vor.u32 1.1754944e-38, %v445
        %v447 = vsel %vm444, %v446, %v442
        %v448 = vmul.f32 %v330, %v447
        %v449 = vrcp.pop %v355
        %v450 = vmul.f32 %v355, %v449
        %v451 = vsub.f32 1.0, %v450
        %v452 = vmul.f32 %v449, %v451
        %v453 = vadd.f32 %v449, %v452
        %vm454 = vweird.f32 %v355
        %vm455 = vweird.f32 %v449
        %vm456 = vmor %vm454, %vm455
        %v457 = vsel %vm456, %v449, %v453
        %v458 = vand.u32 2147483647, %v355
        %vm459 = vcmp.eq.f32.partialorder %v458, 8.507059e+37
        %v460 = vand.u32 %v355, 2147483648
        %v461 = vor.u32 1.1754944e-38, %v460
        %v462 = vsel %vm459, %v461, %v457
        %v463 = vmul.f32 %v332, %v462
        %v464 = vrcp.pop %v358
        %v465 = vmul.f32 %v358, %v464
        %v466 = vsub.f32 1.0, %v465
        %v467 = vmul.f32 %v464, %v466
        %v468 = vadd.f32 %v464, %v467
        %vm469 = vweird.f32 %v358
        %vm470 = vweird.f32 %v464
        %vm471 = vmor %vm469, %vm470
        %v472 = vsel %vm471, %v464, %v468
        %v473 = vand.u32 2147483647, %v358
        %vm474 = vcmp.eq.f32.partialorder %v473, 8.507059e+37
        %v475 = vand.u32 %v358, 2147483648
        %v476 = vor.u32 1.1754944e-38, %v475
        %v477 = vsel %vm474, %v476, %v472
        %v478 = vmul.f32 %v334, %v477
        %479 = vst.msk [vmem:[%s154] sm:$0xff] %vm286, %v373
        %480 = vst.msk [vmem:[%s154 + $0x8] sm:$0xff] %vm286, %v388
        %481 = vst.msk [vmem:[%s154 + $0x10] sm:$0xff] %vm286, %v403
        %482 = vst.msk [vmem:[%s154 + $0x18] sm:$0xff] %vm286, %v418
        %483 = vst.msk [vmem:[%s154 + $0x20] sm:$0xff] %vm286, %v433
        %484 = vst.msk [vmem:[%s154 + $0x28] sm:$0xff] %vm286, %v448
        %485 = vst.msk [vmem:[%s154 + $0x30] sm:$0xff] %vm286, %v463
        %486 = vst.msk [vmem:[%s154 + $0x38] sm:$0xff] %vm286, %v478
        %p487 = scmp.lt.s32.totalorder %s15, 3
        %s488 = scalar_select %p487, %s15, 3
        %s489 = smul.addr %s488, 8
        %s490 = smul.addr %s489, 8
        %s491 = scalar_lea.vmem %s2, %s490
        // Predicated region
        $region37: #{gabor_self_attention_forward.2} parent=27 // pred_check
          %p492 = pneg %p75
        $region38: #{gabor_self_attention_forward.2} parent=27 // pred_check_branch
          %494 = sbr.rel (%p492) target = $region40
        $region39: #{gabor_self_attention_forward.2} parent=27 // pred_region
          _
        $region40: #{gabor_self_attention_forward.2} parent=27 // pred_fallthru
          _
      $region28: #{gabor_self_attention_forward.2} parent=5 // pred_fallthru
        _
      %p495 = scmp.le.s32.totalorder 2, %s10
      // Predicated region
      $region41: #{gabor_self_attention_forward.2} parent=5 // pred_check
        %p496 = pneg %p495
      $region42: #{gabor_self_attention_forward.2} parent=5 // pred_check_branch
        %498 = sbr.rel (%p496) target = $region44
      $region43: #{gabor_self_attention_forward.2} parent=5 // pred_region
        %s499 = ssub.s32 %s10, 2
        // Predicated region
        $region45: #{gabor_self_attention_forward.2} parent=43 // pred_check
          %p500 = pneg %p81
        $region46: #{gabor_self_attention_forward.2} parent=43 // pred_check_branch
          %502 = sbr.rel (%p500) target = $region48
        $region47: #{gabor_self_attention_forward.2} parent=43 // pred_region
          %p503 = scmp.lt.s32.totalorder %s16, 3
          %s504 = scalar_select %p503, %s16, 3
          %s505 = smul.addr %s504, 8
          %s506 = smul.addr %s505, 8
          %s507 = scalar_lea.vmem %s2, %s506
        $region48: #{gabor_self_attention_forward.2} parent=43 // pred_fallthru
          _
      $region44: #{gabor_self_attention_forward.2} parent=5 // pred_fallthru
        _
    $region6: #{gabor_self_attention_forward.2} parent=1 // loop_footer
      %s14 = sadd.s32 1, %s10
    $region7: #{gabor_self_attention_forward.2} parent=1 // loop_footer_branch
      %9 = sbr.rel target = $region3
    $region8: #{gabor_self_attention_forward.2} parent=1 // loop_exit
      _
    %508 = vsyncpa [#allocation3], 1
    %s509 = scalar_lea.sflag [#allocation3], 1
    %510 = vsyncpa %s509, 1
    %511 = vsyncpa [#allocation4], 1
    %s512 = scalar_lea.sflag [#allocation4], 1
    %513 = vsyncpa %s512, 1

// kernel: gabor_self_attention_forward.3
$region0: #{gabor_self_attention_forward.3}
  #allocation0 [shape = 'u32[]', space=smem, size = 0x4, offset = 0x4, fixed_abs, tag = 'smem constant byte address 0x4 - core index']
  #allocation1 [shape = 'u32[72,128]{1,0:T(1,128)}', space=vmem, size = 0x9000, scoped, tag = 'internal scratch']
  %s0 = inlined_call_operand.vmem [shape: bf16[64,256], index: 0, kind: input, shape index: {}]
  %s1 = inlined_call_operand.vmem [shape: bf16[2,64,32], index: 1, kind: input, shape index: {}]
  %s2 = inlined_call_operand.vmem [shape: bf16[4,32,32], index: 2, kind: input, shape index: {}]
  %s3 = inlined_call_operand.vmem [shape: f32[1,32], index: 3, kind: input, shape index: {}]
  %s4 = inlined_call_operand.hbm [shape: f32[2,64,32], index: 4, kind: output, shape index: {}]
  %s5 = sld [smem:[#allocation0]]
  $region49: #{gabor_self_attention_forward.3} parent=0
    _
  %s7 = ssub.s32 1, %s5
  %s8 = scalar_select 0, %s7, %s5
  $region1: #{gabor_self_attention_forward.3} parent=0
    #allocation2 [shape = 'u8[65536]{0}', space=vmem, size = 0x10000, scoped, tag = 'output window, operand 0']
    #allocation3 [shape = 's32[2]{0}', space=sflag, size = 0x8, scoped, tag = 'scoped memory for gabor_self_attention_forward.3']
    %9 = vsyncpa [#allocation3], 0
    %s10 = scalar_lea.sflag [#allocation3], 1
    %11 = vsyncpa %s10, 0
    loop: start=0, step=1, limit=4
    $region2: #{gabor_self_attention_forward.3} parent=1 // loop_pre_header
      _
    $region3: #{gabor_self_attention_forward.3} parent=1 // loop_header
      %s13 = sphi 0, %s17
      %p14 = scmp.ge.s32.totalorder %s13, 4
      %s21 = sphi 0, %s21
      %s23 = sphi 0, %s21
      %s24 = sphi 0, %s23
      %s38 = sphi 0, %s24
      %s44 = sphi 0, %s46
      %s47 = sphi 0, %s44
      %s48 = sphi 0, %s47
      %s64 = sphi 0, %s48
      %s68 = sphi 0, %s68
      %s70 = sphi 0, %s68
      %s71 = sphi 0, %s70
      %s85 = sphi 0, %s71
      %s89 = sphi 0, %s89
      %s91 = sphi 0, %s89
      %s92 = sphi 0, %s91
      %s106 = sphi 0, %s92
      %s112 = sphi 0, %s114
      %s115 = sphi 0, %s112
      %s116 = sphi 0, %s115
      %s132 = sphi 0, %s116
    $region4: #{gabor_self_attention_forward.3} parent=1 // loop_header_branch
      %16 = sbr.rel (%p14) target = $region8
    $region5: #{gabor_self_attention_forward.3} parent=1 // loop_body
      %s18 = ssub.s32 %s13, 1
      %s19 = ssub.s32 %s13, 2
      %s20 = sadd.s32 %s13, 1
      %s22 = sadd.s32 %s21, 1
      %p25 = scmp.eq.s32.totalorder %s13, 1
      %p26 = scmp.ne.s32.totalorder %s21, %s23
      %p27 = scmp.eq.s32.totalorder %s13, 0
      %p28 = por %p26, %p27
      %p29 = scmp.ne.s32.totalorder %s21, %s23
      %p30 = scmp.eq.s32.totalorder %s18, 1
      %p31 = por %p29, %p30
      %p32 = scmp.ne.s32.totalorder %s23, %s24
      %p33 = scmp.eq.s32.totalorder %s18, 0
      %p34 = por %p32, %p33
      %p35 = scmp.ne.s32.totalorder %s23, %s24
      %p36 = scmp.eq.s32.totalorder %s19, 1
      %p37 = por %p35, %p36
      %p39 = scmp.ne.s32.totalorder %s24, %s38
      %p40 = scmp.eq.s32.totalorder %s19, 0
      %p41 = por %p39, %p40
      %s42 = ssub.s32 %s13, %s20
      %p43 = scmp.eq.s32.totalorder %s42, 0
      %s45 = sadd.s32 %s44, 1
      %s46 = scalar_select %p43, %s44, %s45
      %p49 = pneg %p43
      %p50 = scmp.eq.s32.totalorder %s13, 1
      %p51 = por %p49, %p50
      %p52 = scmp.ne.s32.totalorder %s44, %s47
      %p53 = scmp.eq.s32.totalorder %s13, 0
      %p54 = por %p52, %p53
      %p55 = scmp.ne.s32.totalorder %s44, %s47
      %p56 = scmp.eq.s32.totalorder %s18, 1
      %p57 = por %p55, %p56
      %p58 = scmp.ne.s32.totalorder %s47, %s48
      %p59 = scmp.eq.s32.totalorder %s18, 0
      %p60 = por %p58, %p59
      %p61 = scmp.ne.s32.totalorder %s47, %s48
      %p62 = scmp.eq.s32.totalorder %s19, 1
      %p63 = por %p61, %p62
      %p65 = scmp.ne.s32.totalorder %s48, %s64
      %p66 = scmp.eq.s32.totalorder %s19, 0
      %p67 = por %p65, %p66
      %s69 = sadd.s32 %s68, 1
      %p72 = scmp.eq.s32.totalorder %s13, 1
      %p73 = scmp.ne.s32.totalorder %s68, %s70
      %p74 = scmp.eq.s32.totalorder %s13, 0
      %p75 = por %p73, %p74
      %p76 = scmp.ne.s32.totalorder %s68, %s70
      %p77 = scmp.eq.s32.totalorder %s18, 1
      %p78 = por %p76, %p77
      %p79 = scmp.ne.s32.totalorder %s70, %s71
      %p80 = scmp.eq.s32.totalorder %s18, 0
      %p81 = por %p79, %p80
      %p82 = scmp.ne.s32.totalorder %s70, %s71
      %p83 = scmp.eq.s32.totalorder %s19, 1
      %p84 = por %p82, %p83
      %p86 = scmp.ne.s32.totalorder %s71, %s85
      %p87 = scmp.eq.s32.totalorder %s19, 0
      %p88 = por %p86, %p87
      %s90 = sadd.s32 %s89, 1
      %p93 = scmp.eq.s32.totalorder %s13, 1
      %p94 = scmp.ne.s32.totalorder %s89, %s91
      %p95 = scmp.eq.s32.totalorder %s13, 0
      %p96 = por %p94, %p95
      %p97 = scmp.ne.s32.totalorder %s89, %s91
      %p98 = scmp.eq.s32.totalorder %s18, 1
      %p99 = por %p97, %p98
      %p100 = scmp.ne.s32.totalorder %s91, %s92
      %p101 = scmp.eq.s32.totalorder %s18, 0
      %p102 = por %p100, %p101
      %p103 = scmp.ne.s32.totalorder %s91, %s92
      %p104 = scmp.eq.s32.totalorder %s19, 1
      %p105 = por %p103, %p104
      %p107 = scmp.ne.s32.totalorder %s92, %s106
      %p108 = scmp.eq.s32.totalorder %s19, 0
      %p109 = por %p107, %p108
      %s110 = ssub.s32 %s13, %s20
      %p111 = scmp.eq.s32.totalorder %s110, 0
      %s113 = sadd.s32 %s112, 1
      %s114 = scalar_select %p111, %s112, %s113
      %p117 = pneg %p111
      %p118 = scmp.eq.s32.totalorder %s13, 1
      %p119 = por %p117, %p118
      %p120 = scmp.ne.s32.totalorder %s112, %s115
      %p121 = scmp.eq.s32.totalorder %s13, 0
      %p122 = por %p120, %p121
      %p123 = scmp.ne.s32.totalorder %s112, %s115
      %p124 = scmp.eq.s32.totalorder %s18, 1
      %p125 = por %p123, %p124
      %p126 = scmp.ne.s32.totalorder %s115, %s116
      %p127 = scmp.eq.s32.totalorder %s18, 0
      %p128 = por %p126, %p127
      %p129 = scmp.ne.s32.totalorder %s115, %s116
      %p130 = scmp.eq.s32.totalorder %s19, 1
      %p131 = por %p129, %p130
      %p133 = scmp.ne.s32.totalorder %s116, %s132
      %p134 = scmp.eq.s32.totalorder %s19, 0
      %p135 = por %p133, %p134
      %p136 = scmp.le.s32.totalorder 1, %s13
      %p137 = scmp.lt.s32.totalorder %s13, 3
      %p138 = pnand %p136, %p137
      %p139 = pneg %p138
      // Predicated region
      $region9: #{gabor_self_attention_forward.3} parent=5 // pred_check
        _
      $region10: #{gabor_self_attention_forward.3} parent=5 // pred_check_branch
        %141 = sbr.rel (%p138) target = $region12
      $region11: #{gabor_self_attention_forward.3} parent=5 // pred_region
        %s142 = ssub.s32 %s13, 1
        // Predicated region
        $region13: #{gabor_self_attention_forward.3} parent=11 // pred_check
          %p143 = pneg %p34
        $region14: #{gabor_self_attention_forward.3} parent=11 // pred_check_branch
          %145 = sbr.rel (%p143) target = $region16
        $region15: #{gabor_self_attention_forward.3} parent=11 // pred_region
          _
        $region16: #{gabor_self_attention_forward.3} parent=11 // pred_fallthru
          _
        // Predicated region
        $region17: #{gabor_self_attention_forward.3} parent=11 // pred_check
          %p146 = pneg %p81
        $region18: #{gabor_self_attention_forward.3} parent=11 // pred_check_branch
          %148 = sbr.rel (%p146) target = $region20
        $region19: #{gabor_self_attention_forward.3} parent=11 // pred_region
          _
        $region20: #{gabor_self_attention_forward.3} parent=11 // pred_fallthru
          _
        // Predicated region
        $region21: #{gabor_self_attention_forward.3} parent=11 // pred_check
          %p149 = pneg %p102
        $region22: #{gabor_self_attention_forward.3} parent=11 // pred_check_branch
          %151 = sbr.rel (%p149) target = $region24
        $region23: #{gabor_self_attention_forward.3} parent=11 // pred_region
          _
        $region24: #{gabor_self_attention_forward.3} parent=11 // pred_fallthru
          _
      $region12: #{gabor_self_attention_forward.3} parent=5 // pred_fallthru
        _
      %p152 = scmp.lt.s32.totalorder %s13, 2
      // Predicated region
      $region25: #{gabor_self_attention_forward.3} parent=5 // pred_check
        %p153 = pneg %p152
      $region26: #{gabor_self_attention_forward.3} parent=5 // pred_check_branch
        %155 = sbr.rel (%p153) target = $region28
      $region27: #{gabor_self_attention_forward.3} parent=5 // pred_region
        // Predicated region
        $region29: #{gabor_self_attention_forward.3} parent=27 // pred_check
          %p156 = pneg %p54
        $region30: #{gabor_self_attention_forward.3} parent=27 // pred_check_branch
          %158 = sbr.rel (%p156) target = $region32
        $region31: #{gabor_self_attention_forward.3} parent=27 // pred_region
          %p159 = scmp.lt.s32.totalorder %s13, 1
          %s160 = scalar_select %p159, %s13, 1
          %s161 = smul.addr %s160, 8
          %s162 = smul.addr %s161, 4
          %s163 = scalar_lea.vmem %s1, %s162
        $region32: #{gabor_self_attention_forward.3} parent=27 // pred_fallthru
          _
      $region28: #{gabor_self_attention_forward.3} parent=5 // pred_fallthru
        _
      %p164 = scmp.le.s32.totalorder 1, %s13
      %p165 = scmp.lt.s32.totalorder %s13, 3
      %p166 = pnand %p164, %p165
      %p167 = pneg %p166
      // Predicated region
      $region33: #{gabor_self_attention_forward.3} parent=5 // pred_check
        _
      $region34: #{gabor_self_attention_forward.3} parent=5 // pred_check_branch
        %169 = sbr.rel (%p166) target = $region36
      $region35: #{gabor_self_attention_forward.3} parent=5 // pred_region
        %s170 = ssub.s32 %s13, 1
        %p171 = pneg %p34
        %p172 = pneg %p31
        %p173 = scmp.lt.s32.totalorder %s18, 1
        %s174 = scalar_select %p173, %s18, 1
        %s175 = smul.addr %s174, 8
        %s176 = smul.addr %s175, 4
        %s177 = scalar_lea.vmem %s1, %s176
        %p178 = pneg %p60
        %p179 = pneg %p57
        %p180 = pneg %p81
        %p181 = pneg %p78
        %p182 = pneg %p102
        %p183 = pneg %p99
        %p184 = pneg %p128
        %p185 = pneg %p125
        %s186 = sand.u32 %s115, 1
        %s187 = scalar_lea.sflag [#allocation3], %s186
        %s188 = sand.u32 %s115, 1
        %s189 = smul.addr %s188, 64
        %s190 = scalar_lea.vmem [#allocation2], %s189
        %p191 = scmp.lt.s32.totalorder %s18, 1
        %s192 = scalar_select %p191, %s18, 1
        %s193 = smul.addr %s192, 8
        %s194 = smul.addr %s193, 4
        %s195 = scalar_lea.vmem %s1, %s194
        %v197 = vld [vmem:[%s195] sm:$0xf]
        %v198 = vld [vmem:[%s195 + $0x4] sm:$0xf]
        %v199 = vld [vmem:[%s195 + $0x8] sm:$0xf]
        %v200 = vld [vmem:[%s195 + $0xc] sm:$0xf]
        %v201 = vld [vmem:[%s195 + $0x10] sm:$0xf]
        %v202 = vld [vmem:[%s195 + $0x14] sm:$0xf]
        %v203 = vld [vmem:[%s195 + $0x18] sm:$0xf]
        %v204 = vld [vmem:[%s195 + $0x1c] sm:$0xf]
        %v205 = vld [vmem:[%s2] sm:$0xf]
        %v206 = vld [vmem:[%s2 + $0x4] sm:$0xf]
        %v207 = vld [vmem:[%s2 + $0x8] sm:$0xf]
        %v208 = vld [vmem:[%s2 + $0xc] sm:$0xf]
        %v217 = vunpack.c.l.b16 %v197
        %v218 = vunpack.c.l.b16 %v198
        %v219 = vunpack.c.l.b16 %v199
        %v220 = vunpack.c.l.b16 %v200
        %v221 = vunpack.c.l.b16 %v201
        %v222 = vunpack.c.l.b16 %v202
        %v223 = vunpack.c.l.b16 %v203
        %v224 = vunpack.c.l.b16 %v204
        %v225 = vpack.c.b16 %v218, %v217
        %v226 = vpack.c.b16 %v220, %v219
        %v227 = vpack.c.b16 %v222, %v221
        %v228 = vpack.c.b16 %v224, %v223
        %v233 = vunpack.c.l.b16 %v205
        %v234 = vunpack.c.l.b16 %v206
        %v235 = vunpack.c.l.b16 %v207
        %v236 = vunpack.c.l.b16 %v208
        %v237 = vpack.c.b16 %v234, %v233
        %v238 = vpack.c.b16 %v236, %v235
        %vm241 = vcmask 261120
        %v243 = vsel %vm241, %v225, 0
        %v246 = vsel %vm241, %v226, 0
        %v249 = vsel %vm241, %v227, 0
        %v252 = vsel %vm241, %v228, 0
        %254 = vmatpush.bf16.msra.mxu0 0
        %255 = vmatpush.bf16.msra.mxu0 0
        %256 = vmatpush.bf16.msra.mxu0 0
        %257 = vmatpush.bf16.msra.mxu0 0
        %258 = vmatpush.bf16.msra.mxu0 0
        %259 = vmatpush.bf16.msra.mxu0 0
        %260 = vmatpush.bf16.msra.mxu0 %v238
        %261 = vmatpush.bf16.msra.mxu0 %v237
        %262 = vmatmul.bf16.gmra.mxu0 %v243
        %v263 = vpop.f32.mrf.mxu0
        %v264 = vadd.f32 0.0, %v263
        %v265 = vpop.f32.mrf.mxu0
        %v266 = vadd.f32 0.0, %v265
        %267 = vmatmul.bf16.gmra.mxu0 %v246
        %v268 = vpop.f32.mrf.mxu0
        %v269 = vadd.f32 0.0, %v268
        %v270 = vpop.f32.mrf.mxu0
        %v271 = vadd.f32 0.0, %v270
        %272 = vmatmul.bf16.gmra.mxu0 %v249
        %v273 = vpop.f32.mrf.mxu0
        %v274 = vadd.f32 0.0, %v273
        %v275 = vpop.f32.mrf.mxu0
        %v276 = vadd.f32 0.0, %v275
        %277 = vmatmul.bf16.gmra.mxu0 %v252
        %v278 = vpop.f32.mrf.mxu0
        %v279 = vadd.f32 0.0, %v278
        %v280 = vpop.f32.mrf.mxu0
        %v281 = vadd.f32 0.0, %v280
        %282 = vdwg.mxu0
        %v283 = vpack.c.bf16 %v264, %v264
        %v284 = vpack.c.bf16 %v266, %v266
        %v285 = vpack.c.bf16 %v269, %v269
        %v286 = vpack.c.bf16 %v271, %v271
        %v287 = vpack.c.bf16 %v274, %v274
        %v288 = vpack.c.bf16 %v276, %v276
        %v289 = vpack.c.bf16 %v279, %v279
        %v290 = vpack.c.bf16 %v281, %v281
        %s291 = scalar_lea.vmem %s2, 16
        %v292 = vld [vmem:[%s291] sm:$0xf]
        %v293 = vld [vmem:[%s291 + $0x4] sm:$0xf]
        %v294 = vld [vmem:[%s291 + $0x8] sm:$0xf]
        %v295 = vld [vmem:[%s291 + $0xc] sm:$0xf]
        %v300 = vunpack.c.l.b16 %v292
        %v301 = vunpack.c.l.b16 %v293
        %v302 = vunpack.c.l.b16 %v294
        %v303 = vunpack.c.l.b16 %v295
        %v304 = vpack.c.b16 %v301, %v300
        %v305 = vpack.c.b16 %v303, %v302
        %308 = vmatpush.bf16.msra.mxu0 0
        %309 = vmatpush.bf16.msra.mxu0 0
        %310 = vmatpush.bf16.msra.mxu0 0
        %311 = vmatpush.bf16.msra.mxu0 0
        %312 = vmatpush.bf16.msra.mxu0 0
        %313 = vmatpush.bf16.msra.mxu0 0
        %314 = vmatpush.bf16.msra.mxu0 %v305
        %315 = vmatpush.bf16.msra.mxu0 %v304
        %316 = vmatmul.bf16.gmra.mxu0 %v243
        %v317 = vpop.f32.mrf.mxu0
        %v318 = vadd.f32 0.0, %v317
        %v319 = vpop.f32.mrf.mxu0
        %v320 = vadd.f32 0.0, %v319
        %321 = vmatmul.bf16.gmra.mxu0 %v246
        %v322 = vpop.f32.mrf.mxu0
        %v323 = vadd.f32 0.0, %v322
        %v324 = vpop.f32.mrf.mxu0
        %v325 = vadd.f32 0.0, %v324
        %326 = vmatmul.bf16.gmra.mxu0 %v249
        %v327 = vpop.f32.mrf.mxu0
        %v328 = vadd.f32 0.0, %v327
        %v329 = vpop.f32.mrf.mxu0
        %v330 = vadd.f32 0.0, %v329
        %331 = vmatmul.bf16.gmra.mxu0 %v252
        %v332 = vpop.f32.mrf.mxu0
        %v333 = vadd.f32 0.0, %v332
        %v334 = vpop.f32.mrf.mxu0
        %v335 = vadd.f32 0.0, %v334
        %336 = vdwg.mxu0
        %v337 = vpack.c.bf16 %v318, %v318
        %v338 = vpack.c.bf16 %v320, %v320
        %v339 = vpack.c.bf16 %v323, %v323
        %v340 = vpack.c.bf16 %v325, %v325
        %v341 = vpack.c.bf16 %v328, %v328
        %v342 = vpack.c.bf16 %v330, %v330
        %v343 = vpack.c.bf16 %v333, %v333
        %v344 = vpack.c.bf16 %v335, %v335
        %s345 = scalar_lea.vmem %s2, 32
        %v346 = vld [vmem:[%s345] sm:$0xf]
        %v347 = vld [vmem:[%s345 + $0x4] sm:$0xf]
        %v348 = vld [vmem:[%s345 + $0x8] sm:$0xf]
        %v349 = vld [vmem:[%s345 + $0xc] sm:$0xf]
        %v354 = vunpack.c.l.b16 %v346
        %v355 = vunpack.c.l.b16 %v347
        %v356 = vunpack.c.l.b16 %v348
        %v357 = vunpack.c.l.b16 %v349
        %v358 = vpack.c.b16 %v355, %v354
        %v359 = vpack.c.b16 %v357, %v356
        %362 = vmatpush.bf16.msra.mxu0 0
        %363 = vmatpush.bf16.msra.mxu0 0
        %364 = vmatpush.bf16.msra.mxu0 0
        %365 = vmatpush.bf16.msra.mxu0 0
        %366 = vmatpush.bf16.msra.mxu0 0
        %367 = vmatpush.bf16.msra.mxu0 0
        %368 = vmatpush.bf16.msra.mxu0 %v359
        %369 = vmatpush.bf16.msra.mxu0 %v358
        %370 = vmatmul.bf16.gmra.mxu0 %v243
        %v371 = vpop.f32.mrf.mxu0
        %v372 = vadd.f32 0.0, %v371
        %v373 = vpop.f32.mrf.mxu0
        %v374 = vadd.f32 0.0, %v373
        %375 = vmatmul.bf16.gmra.mxu0 %v246
        %v376 = vpop.f32.mrf.mxu0
        %v377 = vadd.f32 0.0, %v376
        %v378 = vpop.f32.mrf.mxu0
        %v379 = vadd.f32 0.0, %v378
        %380 = vmatmul.bf16.gmra.mxu0 %v249
        %v381 = vpop.f32.mrf.mxu0
        %v382 = vadd.f32 0.0, %v381
        %v383 = vpop.f32.mrf.mxu0
        %v384 = vadd.f32 0.0, %v383
        %385 = vmatmul.bf16.gmra.mxu0 %v252
        %v386 = vpop.f32.mrf.mxu0
        %v387 = vadd.f32 0.0, %v386
        %v388 = vpop.f32.mrf.mxu0
        %v389 = vadd.f32 0.0, %v388
        %390 = vdwg.mxu0
        %v391 = vpack.c.bf16 %v372, %v372
        %v392 = vpack.c.bf16 %v374, %v374
        %v393 = vpack.c.bf16 %v377, %v377
        %v394 = vpack.c.bf16 %v379, %v379
        %v395 = vpack.c.bf16 %v382, %v382
        %v396 = vpack.c.bf16 %v384, %v384
        %v397 = vpack.c.bf16 %v387, %v387
        %v398 = vpack.c.bf16 %v389, %v389
        %s399 = scalar_lea.vmem %s2, 48
        %v400 = vld [vmem:[%s399] sm:$0xf]
        %v401 = vld [vmem:[%s399 + $0x4] sm:$0xf]
        %v402 = vld [vmem:[%s399 + $0x8] sm:$0xf]
        %v403 = vld [vmem:[%s399 + $0xc] sm:$0xf]
        %v408 = vunpack.c.l.b16 %v400
        %v409 = vunpack.c.l.b16 %v401
        %v410 = vunpack.c.l.b16 %v402
        %v411 = vunpack.c.l.b16 %v403
        %v412 = vpack.c.b16 %v409, %v408
        %v413 = vpack.c.b16 %v411, %v410
        %416 = vmatpush.bf16.msra.mxu0 0
        %417 = vmatpush.bf16.msra.mxu0 0
        %418 = vmatpush.bf16.msra.mxu0 0
        %419 = vmatpush.bf16.msra.mxu0 0
        %420 = vmatpush.bf16.msra.mxu0 0
        %421 = vmatpush.bf16.msra.mxu0 0
        %422 = vmatpush.bf16.msra.mxu0 %v413
        %423 = vmatpush.bf16.msra.mxu0 %v412
        %424 = vmatmul.bf16.gmra.mxu0 %v243
        %v425 = vpop.f32.mrf.mxu0
        %v426 = vadd.f32 0.0, %v425
        %v427 = vpop.f32.mrf.mxu0
        %v428 = vadd.f32 0.0, %v427
        %429 = vmatmul.bf16.gmra.mxu0 %v246
        %v430 = vpop.f32.mrf.mxu0
        %v431 = vadd.f32 0.0, %v430
        %v432 = vpop.f32.mrf.mxu0
        %v433 = vadd.f32 0.0, %v432
        %434 = vmatmul.bf16.gmra.mxu0 %v249
        %v435 = vpop.f32.mrf.mxu0
        %v436 = vadd.f32 0.0, %v435
        %v437 = vpop.f32.mrf.mxu0
        %v438 = vadd.f32 0.0, %v437
        %439 = vmatmul.bf16.gmra.mxu0 %v252
        %v440 = vpop.f32.mrf.mxu0
        %v441 = vadd.f32 0.0, %v440
        %v442 = vpop.f32.mrf.mxu0
        %v443 = vadd.f32 0.0, %v442
        %444 = vdwg.mxu0
        %v445 = vpack.c.bf16 %v426, %v426
        %v446 = vpack.c.bf16 %v428, %v428
        %v447 = vpack.c.bf16 %v431, %v431
        %v448 = vpack.c.bf16 %v433, %v433
        %v449 = vpack.c.bf16 %v436, %v436
        %v450 = vpack.c.bf16 %v438, %v438
        %v451 = vpack.c.bf16 %v441, %v441
        %v452 = vpack.c.bf16 %v443, %v443
        %v453 = vld [vmem:[%s0] sm:$0xff]
        %v454 = vld [vmem:[%s0 + $0x8] sm:$0xff]
        %v455 = vld [vmem:[%s0 + $0x10] sm:$0xff]
        %v456 = vld [vmem:[%s0 + $0x18] sm:$0xff]
        %v457 = vld [vmem:[%s0 + $0x20] sm:$0xff]
        %v458 = vld [vmem:[%s0 + $0x28] sm:$0xff]
        %v459 = vld [vmem:[%s0 + $0x30] sm:$0xff]
        %v460 = vld [vmem:[%s0 + $0x38] sm:$0xff]
        %v461 = vld [vmem:[%s3] sm:$0x1]
        %v463 = vperm.slane %v461, 0
        %v473 = vunpack.c.l.b16 %v283
        %v474 = vunpack.c.l.b16 %v284
        %v475 = vunpack.c.l.b16 %v285
        %v476 = vunpack.c.l.b16 %v286
        %v477 = vunpack.c.l.b16 %v287
        %v478 = vunpack.c.l.b16 %v288
        %v479 = vunpack.c.l.b16 %v289
        %v480 = vunpack.c.l.b16 %v290
        %v481 = vpack.c.b16 %v474, %v473
        %v482 = vpack.c.b16 %v476, %v475
        %v483 = vpack.c.b16 %v478, %v477
        %v484 = vpack.c.b16 %v480, %v479
        %v497 = vunpack.c.l.b16 %v337
        %v498 = vunpack.c.l.b16 %v338
        %v499 = vunpack.c.l.b16 %v339
        %v500 = vunpack.c.l.b16 %v340
        %v501 = vunpack.c.l.b16 %v341
        %v502 = vunpack.c.l.b16 %v342
        %v503 = vunpack.c.l.b16 %v343
        %v504 = vunpack.c.l.b16 %v344
        %v505 = vpack.c.b16 %v498, %v497
        %v506 = vpack.c.b16 %v500, %v499
        %v507 = vpack.c.b16 %v502, %v501
        %v508 = vpack.c.b16 %v504, %v503
        %v521 = vunpack.c.l.b16 %v391
        %v522 = vunpack.c.l.b16 %v392
        %v523 = vunpack.c.l.b16 %v393
        %v524 = vunpack.c.l.b16 %v394
        %v525 = vunpack.c.l.b16 %v395
        %v526 = vunpack.c.l.b16 %v396
        %v527 = vunpack.c.l.b16 %v397
        %v528 = vunpack.c.l.b16 %v398
        %v529 = vpack.c.b16 %v522, %v521
        %v530 = vpack.c.b16 %v524, %v523
        %v531 = vpack.c.b16 %v526, %v525
        %v532 = vpack.c.b16 %v528, %v527
        %v545 = vunpack.c.l.b16 %v445
        %v546 = vunpack.c.l.b16 %v446
        %v547 = vunpack.c.l.b16 %v447
        %v548 = vunpack.c.l.b16 %v448
        %v549 = vunpack.c.l.b16 %v449
        %v550 = vunpack.c.l.b16 %v450
        %v551 = vunpack.c.l.b16 %v451
        %v552 = vunpack.c.l.b16 %v452
        %v553 = vpack.c.b16 %v546, %v545
        %v554 = vpack.c.b16 %v548, %v547
        %v555 = vpack.c.b16 %v550, %v549
        %v556 = vpack.c.b16 %v552, %v551
        %v569 = vunpack.c.l.b16 %v453
        %v570 = vunpack.c.h.b16 %v453
        %v571 = vunpack.c.l.b16 %v454
        %v572 = vunpack.c.h.b16 %v454
        %v573 = vunpack.c.l.b16 %v455
        %v574 = vunpack.c.h.b16 %v455
        %v575 = vunpack.c.l.b16 %v456
        %v576 = vunpack.c.h.b16 %v456
        %v577 = vunpack.c.l.b16 %v457
        %v578 = vunpack.c.h.b16 %v457
        %v579 = vunpack.c.l.b16 %v458
        %v580 = vunpack.c.h.b16 %v458
        %v581 = vunpack.c.l.b16 %v459
        %v582 = vunpack.c.h.b16 %v459
        %v583 = vunpack.c.l.b16 %v460
        %v584 = vunpack.c.h.b16 %v460
        %v585 = vpack.c.b16 %v571, %v569
        %v586 = vpack.c.b16 %v572, %v570
        %v587 = vpack.c.b16 %v575, %v573
        %v588 = vpack.c.b16 %v576, %v574
        %v589 = vpack.c.b16 %v579, %v577
        %v590 = vpack.c.b16 %v580, %v578
        %v591 = vpack.c.b16 %v583, %v581
        %v592 = vpack.c.b16 %v584, %v582
        %601 = vmatpush.bf16.msra.mxu0 %v508
        %602 = vmatpush.bf16.msra.mxu0 %v507
        %603 = vmatpush.bf16.msra.mxu0 %v506
        %604 = vmatpush.bf16.msra.mxu0 %v505
        %605 = vmatpush.bf16.msra.mxu0 %v484
        %606 = vmatpush.bf16.msra.mxu0 %v483
        %607 = vmatpush.bf16.msra.mxu0 %v482
        %608 = vmatpush.bf16.msra.mxu0 %v481
        %609 = vmatmul.bf16.gmra.mxu0 %v585
        %v610 = vpop.f32.mrf.mxu0
        %v611 = vadd.f32 %v463, %v610
        %v612 = vpop.f32.mrf.mxu0
        %v613 = vadd.f32 %v463, %v612
        %614 = vmatmul.bf16.gmra.mxu0 %v587
        %v615 = vpop.f32.mrf.mxu0
        %v616 = vadd.f32 %v463, %v615
        %v617 = vpop.f32.mrf.mxu0
        %v618 = vadd.f32 %v463, %v617
        %619 = vmatmul.bf16.gmra.mxu0 %v589
        %v620 = vpop.f32.mrf.mxu0
        %v621 = vadd.f32 %v463, %v620
        %v622 = vpop.f32.mrf.mxu0
        %v623 = vadd.f32 %v463, %v622
        %624 = vmatmul.bf16.gmra.mxu0 %v591
        %v625 = vpop.f32.mrf.mxu0
        %v626 = vadd.f32 %v463, %v625
        %v627 = vpop.f32.mrf.mxu0
        %v628 = vadd.f32 %v463, %v627
        %629 = vdwg.mxu0
        %630 = vmatpush.bf16.msra.mxu0 %v556
        %631 = vmatpush.bf16.msra.mxu0 %v555
        %632 = vmatpush.bf16.msra.mxu0 %v554
        %633 = vmatpush.bf16.msra.mxu0 %v553
        %634 = vmatpush.bf16.msra.mxu0 %v532
        %635 = vmatpush.bf16.msra.mxu0 %v531
        %636 = vmatpush.bf16.msra.mxu0 %v530
        %637 = vmatpush.bf16.msra.mxu0 %v529
        %638 = vmatmul.bf16.gmra.mxu0 %v586
        %v639 = vpop.f32.mrf.mxu0
        %v640 = vadd.f32 %v611, %v639
        %v641 = vpop.f32.mrf.mxu0
        %v642 = vadd.f32 %v613, %v641
        %643 = vmatmul.bf16.gmra.mxu0 %v588
        %v644 = vpop.f32.mrf.mxu0
        %v645 = vadd.f32 %v616, %v644
        %v646 = vpop.f32.mrf.mxu0
        %v647 = vadd.f32 %v618, %v646
        %648 = vmatmul.bf16.gmra.mxu0 %v590
        %v649 = vpop.f32.mrf.mxu0
        %v650 = vadd.f32 %v621, %v649
        %v651 = vpop.f32.mrf.mxu0
        %v652 = vadd.f32 %v623, %v651
        %653 = vmatmul.bf16.gmra.mxu0 %v592
        %v654 = vpop.f32.mrf.mxu0
        %v655 = vadd.f32 %v626, %v654
        %v656 = vpop.f32.mrf.mxu0
        %v657 = vadd.f32 %v628, %v656
        %658 = vdwg.mxu0
        %659 = vst.msk [vmem:[%s190] sm:$0xff] %vm241, %v640
        %660 = vst.msk [vmem:[%s190 + $0x8] sm:$0xff] %vm241, %v642
        %661 = vst.msk [vmem:[%s190 + $0x10] sm:$0xff] %vm241, %v645
        %662 = vst.msk [vmem:[%s190 + $0x18] sm:$0xff] %vm241, %v647
        %663 = vst.msk [vmem:[%s190 + $0x20] sm:$0xff] %vm241, %v650
        %664 = vst.msk [vmem:[%s190 + $0x28] sm:$0xff] %vm241, %v652
        %665 = vst.msk [vmem:[%s190 + $0x30] sm:$0xff] %vm241, %v655
        %666 = vst.msk [vmem:[%s190 + $0x38] sm:$0xff] %vm241, %v657
        %s667 = sand.u32 %s115, 1
        %s668 = scalar_lea.sflag [#allocation3], %s667
        %s669 = sand.u32 %s115, 1
        %s670 = smul.addr %s669, 64
        %s671 = scalar_lea.vmem [#allocation2], %s670
        // Predicated region
        $region37: #{gabor_self_attention_forward.3} parent=35 // pred_check
          %p672 = pneg %p125
        $region38: #{gabor_self_attention_forward.3} parent=35 // pred_check_branch
          %674 = sbr.rel (%p672) target = $region40
        $region39: #{gabor_self_attention_forward.3} parent=35 // pred_region
          %676 = vsyncadd %s668, 0
          %s677 = smul.addr %s18, 8
          %s678 = smul.addr %s677, 8
          %s679 = scalar_lea.hbm %s4, %s678
          %s680 = sshll.u32 %s671, 4
          %s681 = int_to_ptr.vmem [resolvable:$true] %s680
          %s682 = sshll.u32 %s679, 4
          %s683 = int_to_ptr.hbm [resolvable:$true] %s682
          %688 = dma.vmem_to_hbm [thread:$0]  %s681, 1024, %s683, %s668, 128, 128, 8
        $region40: #{gabor_self_attention_forward.3} parent=35 // pred_fallthru
          _
      $region36: #{gabor_self_attention_forward.3} parent=5 // pred_fallthru
        _
      %p689 = scmp.le.s32.totalorder 2, %s13
      // Predicated region
      $region41: #{gabor_self_attention_forward.3} parent=5 // pred_check
        %p690 = pneg %p689
      $region42: #{gabor_self_attention_forward.3} parent=5 // pred_check_branch
        %692 = sbr.rel (%p690) target = $region44
      $region43: #{gabor_self_attention_forward.3} parent=5 // pred_region
        %s693 = ssub.s32 %s13, 2
        // Predicated region
        $region45: #{gabor_self_attention_forward.3} parent=43 // pred_check
          %p694 = pneg %p131
        $region46: #{gabor_self_attention_forward.3} parent=43 // pred_check_branch
          %696 = sbr.rel (%p694) target = $region48
        $region47: #{gabor_self_attention_forward.3} parent=43 // pred_region
          %s697 = sand.u32 %s116, 1
          %s698 = scalar_lea.sflag [#allocation3], %s697
          %s699 = sand.u32 %s116, 1
          %s700 = smul.addr %s699, 64
          %s701 = scalar_lea.vmem [#allocation2], %s700
          %703 = dma.done %s698, 1024
        $region48: #{gabor_self_attention_forward.3} parent=43 // pred_fallthru
          _
      $region44: #{gabor_self_attention_forward.3} parent=5 // pred_fallthru
        _
    $region6: #{gabor_self_attention_forward.3} parent=1 // loop_footer
      %s17 = sadd.s32 1, %s13
    $region7: #{gabor_self_attention_forward.3} parent=1 // loop_footer_branch
      %12 = sbr.rel target = $region3
    $region8: #{gabor_self_attention_forward.3} parent=1 // loop_exit
      _
    %704 = vsyncpa [#allocation3], 1
    %s705 = scalar_lea.sflag [#allocation3], 1
    %706 = vsyncpa %s705, 1

</llo_original>
